<compile_context>
chip_gen: v5e
topology: v5e:2x2
jax: 0.10.0
libtpu: 0.0.40
codegen_flags: <defaults>
</compile_context>

<pallas_src>
import jax
import jax.numpy as jnp
from jax.experimental import pallas as pl
from jax.experimental.pallas import tpu as pltpu

# ----- configs (mirrors Model.__init__) -----
SEQ_LEN = 16
PRED_LEN = 8
ENC_IN = 4
PERIOD_LEN = 4
BASIS_NUM = 4
USE_PERIOD_NORM = True
USE_ORTHOGONAL = True
INDIVIDUAL = False
SEG_NUM_X = SEQ_LEN // PERIOD_LEN          # 4
SEG_NUM_Y = PRED_LEN // PERIOD_LEN         # 2
PAD_SEQ_LEN = 0
SUBPACK = 2                                # N samples folded onto the sublane axis
ROWS = SUBPACK * PERIOD_LEN                # 8 = full f32 vreg sublane depth
# TODO(synk): individual=True (per-channel nn.Linear list), use_period_norm=False
# (global-mean norm), and pad_seq_len>0 branches are not implemented here.


def _timebase_kernel(x_ref, p_ref, y_ref, nrm_ref):
    # x_ref : (Sx, ROWS, bn) VMEM; row index r = SUBPACK*p + n2half
    # p_ref : (Sx+1, K+Sy) f32 SMEM:
    #         [:Sx, :K]  = w1 centered        [Sx, :K]  = b1
    #         [:Sx, K:]  = w12 effective      [Sx, K:]  = b12 fused bias
    # y_ref : (Sy, ROWS, bn) VMEM out ; nrm_ref : (SUBPACK, bn) VMEM out.

    # prediction path (mean fold included in w12eff/b12):
    #   y[j] = b12[j] + sum_s w12eff[s, j] * x[s]
    for j in range(SEG_NUM_Y):
        acc = x_ref[0] * p_ref[0, BASIS_NUM + j]
        for s in range(1, SEG_NUM_X):
            acc = acc + p_ref[s, BASIS_NUM + j] * x_ref[s]
        y_ref[j] = acc + p_ref[SEG_NUM_X, BASIS_NUM + j]

    # basis (only needed for the orthogonal loss):
    #   bas[k] = b1[k] + sum_s w1c[s, k] * x[s]
    bas = []
    for k in range(BASIS_NUM):
        bk = x_ref[0] * p_ref[0, k]
        for s in range(1, SEG_NUM_X):
            bk = bk + p_ref[s, k] * x_ref[s]
        bas.append(bk + p_ref[SEG_NUM_X, k])

    # per-sample off-diagonal Gram Frobenius norm:
    #   G[k,l] = sum_p basis[p,k]*basis[p,l]   (sum over the p sub-axis of rows)
    #   ||G - diag(G)||_F = sqrt(2 * sum_{k<l} G[k,l]^2)
    ss = None
    for k in range(BASIS_NUM):
        for l in range(k + 1, BASIS_NUM):
            prod = bas[k] * bas[l]                          # (ROWS, bn)
            g = prod[0:SUBPACK]
            for p in range(1, PERIOD_LEN):
                g = g + prod[p * SUBPACK:(p + 1) * SUBPACK]  # (SUBPACK, bn)
            ss = g * g if ss is None else ss + g * g
    if ss is None:   # K == 1 degenerate case
        nrm_ref[...] = jnp.zeros_like(nrm_ref)
    else:
        nrm_ref[...] = jnp.sqrt(2.0 * ss)


def _choose_block(n2):
    """n2 is a multiple of 128 (wrapper pads).  Cap at 512 lanes (vreg budget,
    no spills) and at n2//2 (>=2 grid steps so v7x can use both TensorCores)."""
    for cand in (512, 256, 128):
        if cand <= n2 // 2 and n2 % cand == 0:
            return cand
    return n2   # n2 == 128: single lane-dense block


def timebase_pallas_core(x3, params):
    """x3: (Sx, ROWS, N2) f32, params: (Sx+1, K+Sy) f32
       -> (y3: (Sy, ROWS, N2), norms: (SUBPACK, N2))."""
    sx, rows, n2 = x3.shape
    bn = _choose_block(n2)
    grid = (n2 // bn,)

    smem_spec = pl.BlockSpec(memory_space=pltpu.MemorySpace.SMEM)
    out_shapes = (
        jax.ShapeDtypeStruct((SEG_NUM_Y, rows, n2), jnp.float32),
        jax.ShapeDtypeStruct((SUBPACK, n2), jnp.float32),
    )
    return pl.pallas_call(
        _timebase_kernel,
        out_shape=out_shapes,
        grid_spec=pltpu.PrefetchScalarGridSpec(
            num_scalar_prefetch=0,
            grid=grid,
            in_specs=[
                pl.BlockSpec((sx, rows, bn), lambda i: (0, 0, i)),
                smem_spec,   # merged weights/biases
            ],
            out_specs=[
                pl.BlockSpec((SEG_NUM_Y, rows, bn), lambda i: (0, 0, i)),
                pl.BlockSpec((SUBPACK, bn), lambda i: (0, i)),
            ],
        ),
        compiler_params=pltpu.CompilerParams(
            dimension_semantics=("parallel",)),
    )(x3, params)


def timebase_forward(x, w1, b1, w2, b2):
    """x: (b, t, c) float32 -> (pred: (b, pred_len, c), orthogonal_loss: scalar)."""
    b, t, c = x.shape
    n = b * c

    # Fold period-mean centering + re-add into effective weights:
    #   basis = (x - mean) @ w1 + b1          == x @ w1c    + b1
    #   pred  = mean + (x - mean) @ w12 + b12 == x @ w12eff + b12
    w12 = w1 @ w2                                         # (Sx, Sy) fused
    b12 = b1 @ w2 + b2                                    # (1, Sy)
    w1c = w1 - jnp.mean(w1, axis=0, keepdims=True)        # (Sx, K)
    w12eff = w12 - jnp.mean(w12, axis=0, keepdims=True) + 1.0 / SEG_NUM_X
    params = jnp.concatenate(
        [jnp.concatenate([w1c, w12eff], axis=1),
         jnp.concatenate([b1, b12], axis=1)], axis=0).astype(jnp.float32)

    # Single input transpose; everything below is a free contiguous reshape.
    xt = jnp.transpose(x, (1, 0, 2)).reshape(t, n)        # (t, N), N trailing
    n_pad = ((n + SUBPACK * 128 - 1) // (SUBPACK * 128)) * (SUBPACK * 128)
    if n_pad != n:
        xt = jnp.pad(xt, ((0, 0), (0, n_pad - n)))
    n2 = n_pad // SUBPACK
    # (t, n_pad) -> (Sx, 2*P, n2): row = SUBPACK*p + n2half   (contiguous)
    x3 = xt.reshape(SEG_NUM_X, ROWS, n2)

    y3, norms = timebase_pallas_core(x3, params)

    orthogonal_loss = jnp.mean(norms.reshape(n_pad)[:n])

    # (Sy, ROWS, n2) -> (Sy*P, n_pad) (contiguous) -> drop pad -> (b, Sy*P, c)
    y = y3.reshape(SEG_NUM_Y * PERIOD_LEN, n_pad)[:, :n]
    y = jnp.transpose(y.reshape(SEG_NUM_Y * PERIOD_LEN, b, c), (1, 0, 2))
    return y[:, :PRED_LEN, :], orthogonal_loss


def reference_forward(x, w1, b1, w2, b2):
    """Pure-JAX reference replicating the PyTorch forward (unfused weights)."""
    b, t, c = x.shape
    xp = jnp.transpose(x, (0, 2, 1)).reshape(b, c, SEG_NUM_X, PERIOD_LEN)
    xp = jnp.transpose(xp, (0, 1, 3, 2)).reshape(b * c, PERIOD_LEN, SEG_NUM_X)
    mean = jnp.mean(xp, axis=-1, keepdims=True)
    xc = xp - mean
    basis = xc @ w1 + b1
    y = basis @ w2 + b2
    y = y + mean
    gram = jnp.einsum('npk,npl->nkl', basis, basis)
    off = gram * (1.0 - jnp.eye(BASIS_NUM)[None])
    loss = jnp.mean(jnp.sqrt(jnp.sum(off * off, axis=(1, 2))))
    y = y.reshape(b, c, PERIOD_LEN, SEG_NUM_Y)
    y = jnp.transpose(y, (0, 1, 3, 2)).reshape(b, c, SEG_NUM_Y * PERIOD_LEN)
    y = jnp.transpose(y, (0, 2, 1))
    return y[:, :PRED_LEN, :], loss


if __name__ == "__main__":
    key = jax.random.PRNGKey(0)
    kx, k1, k2, k3, k4 = jax.random.split(key, 5)

    batch = 2
    x = jax.random.normal(kx, (batch, SEQ_LEN, ENC_IN), dtype=jnp.float32)

    # nn.Linear(seg_num_x, basis_num): stored transposed as (Sx, K) / (1, K).
    w1 = jax.random.normal(k1, (SEG_NUM_X, BASIS_NUM), dtype=jnp.float32) * 0.1
    b1 = jax.random.normal(k2, (1, BASIS_NUM), dtype=jnp.float32) * 0.1
    # nn.Linear(basis_num, seg_num_y): stored transposed as (K, Sy) / (1, Sy).
    w2 = jax.random.normal(k3, (BASIS_NUM, SEG_NUM_Y), dtype=jnp.float32) * 0.1
    b2 = jax.random.normal(k4, (1, SEG_NUM_Y), dtype=jnp.float32) * 0.1

    pred, loss = timebase_forward(x, w1, b1, w2, b2)
    pred = jax.block_until_ready(pred)
    loss = jax.block_until_ready(loss)

    pred_ref, loss_ref = reference_forward(x, w1, b1, w2, b2)
    assert pred.shape == (batch, PRED_LEN, ENC_IN), pred.shape
    assert jnp.allclose(pred, pred_ref, atol=1e-4, rtol=1e-4), \
        float(jnp.max(jnp.abs(pred - pred_ref)))
    assert jnp.allclose(loss, loss_ref, atol=1e-4, rtol=1e-4), \
        (float(loss), float(loss_ref))

    print("KERNEL_OK")
</pallas_src>

<mosaic_0001>
module attributes {stable_mosaic.version = 11 : i64} {
  func.func @_timebase_kernel(%arg0: i32, %arg1: memref<4x8x128xf32, #tpu.memory_space<vmem>>, %arg2: memref<5x6xf32, #tpu.memory_space<smem>>, %arg3: memref<2x8x128xf32, #tpu.memory_space<vmem>>, %arg4: memref<2x128xf32, #tpu.memory_space<vmem>>) attributes {dimension_semantics = [#tpu.dimension_semantics<parallel>], iteration_bounds = array<i64: 1>, scalar_prefetch = 0 : i64, scratch_operands = 0 : i64, tpu.core_type = #tpu.core_type<tc>, window_params = [{transform_indices = @transform_0, window_bounds = array<i64: 4, 8, 128>}, {transform_indices = @transform_1, window_bounds = array<i64: 5, 6>}, {transform_indices = @transform_2, window_bounds = array<i64: 2, 8, 128>}, {transform_indices = @transform_3, window_bounds = array<i64: 2, 128>}]} {
    %c0 = arith.constant 0 : index
    %c0_0 = arith.constant 0 : index
    %c0_1 = arith.constant 0 : index
    %0 = vector.load %arg1[%c0, %c0_0, %c0_1] : memref<4x8x128xf32, #tpu.memory_space<vmem>>, vector<1x8x128xf32>
    %1 = vector.shape_cast %0 : vector<1x8x128xf32> to vector<8x128xf32>
    %c0_2 = arith.constant 0 : index
    %c4 = arith.constant 4 : index
    %2 = memref.load %arg2[%c0_2, %c4] : memref<5x6xf32, #tpu.memory_space<smem>>
    %3 = vector.broadcast %2 : f32 to vector<8x128xf32>
    %4 = arith.mulf %1, %3 : vector<8x128xf32>
    %c1 = arith.constant 1 : index
    %c4_3 = arith.constant 4 : index
    %5 = memref.load %arg2[%c1, %c4_3] : memref<5x6xf32, #tpu.memory_space<smem>>
    %c1_4 = arith.constant 1 : index
    %c0_5 = arith.constant 0 : index
    %c0_6 = arith.constant 0 : index
    %6 = vector.load %arg1[%c1_4, %c0_5, %c0_6] : memref<4x8x128xf32, #tpu.memory_space<vmem>>, vector<1x8x128xf32>
    %7 = vector.shape_cast %6 : vector<1x8x128xf32> to vector<8x128xf32>
    %8 = vector.broadcast %5 : f32 to vector<8x128xf32>
    %9 = arith.mulf %8, %7 : vector<8x128xf32>
    %10 = arith.addf %4, %9 : vector<8x128xf32>
    %c2 = arith.constant 2 : index
    %c4_7 = arith.constant 4 : index
    %11 = memref.load %arg2[%c2, %c4_7] : memref<5x6xf32, #tpu.memory_space<smem>>
    %c2_8 = arith.constant 2 : index
    %c0_9 = arith.constant 0 : index
    %c0_10 = arith.constant 0 : index
    %12 = vector.load %arg1[%c2_8, %c0_9, %c0_10] : memref<4x8x128xf32, #tpu.memory_space<vmem>>, vector<1x8x128xf32>
    %13 = vector.shape_cast %12 : vector<1x8x128xf32> to vector<8x128xf32>
    %14 = vector.broadcast %11 : f32 to vector<8x128xf32>
    %15 = arith.mulf %14, %13 : vector<8x128xf32>
    %16 = arith.addf %10, %15 : vector<8x128xf32>
    %c3 = arith.constant 3 : index
    %c4_11 = arith.constant 4 : index
    %17 = memref.load %arg2[%c3, %c4_11] : memref<5x6xf32, #tpu.memory_space<smem>>
    %c3_12 = arith.constant 3 : index
    %c0_13 = arith.constant 0 : index
    %c0_14 = arith.constant 0 : index
    %18 = vector.load %arg1[%c3_12, %c0_13, %c0_14] : memref<4x8x128xf32, #tpu.memory_space<vmem>>, vector<1x8x128xf32>
    %19 = vector.shape_cast %18 : vector<1x8x128xf32> to vector<8x128xf32>
    %20 = vector.broadcast %17 : f32 to vector<8x128xf32>
    %21 = arith.mulf %20, %19 : vector<8x128xf32>
    %22 = arith.addf %16, %21 : vector<8x128xf32>
    %c4_15 = arith.constant 4 : index
    %c4_16 = arith.constant 4 : index
    %23 = memref.load %arg2[%c4_15, %c4_16] : memref<5x6xf32, #tpu.memory_space<smem>>
    %24 = vector.broadcast %23 : f32 to vector<8x128xf32>
    %25 = arith.addf %22, %24 : vector<8x128xf32>
    %c0_17 = arith.constant 0 : index
    %c0_18 = arith.constant 0 : index
    %c0_19 = arith.constant 0 : index
    %26 = vector.load %arg3[%c0_17, %c0_18, %c0_19] : memref<2x8x128xf32, #tpu.memory_space<vmem>>, vector<1x8x128xf32>
    %27 = vector.shape_cast %26 : vector<1x8x128xf32> to vector<8x128xf32>
    %28 = vector.shape_cast %25 : vector<8x128xf32> to vector<1x8x128xf32>
    tpu.vector_store %arg3[%c0_17, %c0_18, %c0_19], %28 {strides = array<i32>} : memref<2x8x128xf32, #tpu.memory_space<vmem>>, vector<1x8x128xf32>,
    %c0_20 = arith.constant 0 : index
    %c0_21 = arith.constant 0 : index
    %c0_22 = arith.constant 0 : index
    %29 = vector.load %arg1[%c0_20, %c0_21, %c0_22] : memref<4x8x128xf32, #tpu.memory_space<vmem>>, vector<1x8x128xf32>
    %30 = vector.shape_cast %29 : vector<1x8x128xf32> to vector<8x128xf32>
    %c0_23 = arith.constant 0 : index
    %c5 = arith.constant 5 : index
    %31 = memref.load %arg2[%c0_23, %c5] : memref<5x6xf32, #tpu.memory_space<smem>>
    %32 = vector.broadcast %31 : f32 to vector<8x128xf32>
    %33 = arith.mulf %30, %32 : vector<8x128xf32>
    %c1_24 = arith.constant 1 : index
    %c5_25 = arith.constant 5 : index
    %34 = memref.load %arg2[%c1_24, %c5_25] : memref<5x6xf32, #tpu.memory_space<smem>>
    %c1_26 = arith.constant 1 : index
    %c0_27 = arith.constant 0 : index
    %c0_28 = arith.constant 0 : index
    %35 = vector.load %arg1[%c1_26, %c0_27, %c0_28] : memref<4x8x128xf32, #tpu.memory_space<vmem>>, vector<1x8x128xf32>
    %36 = vector.shape_cast %35 : vector<1x8x128xf32> to vector<8x128xf32>
    %37 = vector.broadcast %34 : f32 to vector<8x128xf32>
    %38 = arith.mulf %37, %36 : vector<8x128xf32>
    %39 = arith.addf %33, %38 : vector<8x128xf32>
    %c2_29 = arith.constant 2 : index
    %c5_30 = arith.constant 5 : index
    %40 = memref.load %arg2[%c2_29, %c5_30] : memref<5x6xf32, #tpu.memory_space<smem>>
    %c2_31 = arith.constant 2 : index
    %c0_32 = arith.constant 0 : index
    %c0_33 = arith.constant 0 : index
    %41 = vector.load %arg1[%c2_31, %c0_32, %c0_33] : memref<4x8x128xf32, #tpu.memory_space<vmem>>, vector<1x8x128xf32>
    %42 = vector.shape_cast %41 : vector<1x8x128xf32> to vector<8x128xf32>
    %43 = vector.broadcast %40 : f32 to vector<8x128xf32>
    %44 = arith.mulf %43, %42 : vector<8x128xf32>
    %45 = arith.addf %39, %44 : vector<8x128xf32>
    %c3_34 = arith.constant 3 : index
    %c5_35 = arith.constant 5 : index
    %46 = memref.load %arg2[%c3_34, %c5_35] : memref<5x6xf32, #tpu.memory_space<smem>>
    %c3_36 = arith.constant 3 : index
    %c0_37 = arith.constant 0 : index
    %c0_38 = arith.constant 0 : index
    %47 = vector.load %arg1[%c3_36, %c0_37, %c0_38] : memref<4x8x128xf32, #tpu.memory_space<vmem>>, vector<1x8x128xf32>
    %48 = vector.shape_cast %47 : vector<1x8x128xf32> to vector<8x128xf32>
    %49 = vector.broadcast %46 : f32 to vector<8x128xf32>
    %50 = arith.mulf %49, %48 : vector<8x128xf32>
    %51 = arith.addf %45, %50 : vector<8x128xf32>
    %c4_39 = arith.constant 4 : index
    %c5_40 = arith.constant 5 : index
    %52 = memref.load %arg2[%c4_39, %c5_40] : memref<5x6xf32, #tpu.memory_space<smem>>
    %53 = vector.broadcast %52 : f32 to vector<8x128xf32>
    %54 = arith.addf %51, %53 : vector<8x128xf32>
    %c1_41 = arith.constant 1 : index
    %c0_42 = arith.constant 0 : index
    %c0_43 = arith.constant 0 : index
    %55 = vector.load %arg3[%c1_41, %c0_42, %c0_43] : memref<2x8x128xf32, #tpu.memory_space<vmem>>, vector<1x8x128xf32>
    %56 = vector.shape_cast %55 : vector<1x8x128xf32> to vector<8x128xf32>
    %57 = vector.shape_cast %54 : vector<8x128xf32> to vector<1x8x128xf32>
    tpu.vector_store %arg3[%c1_41, %c0_42, %c0_43], %57 {strides = array<i32>} : memref<2x8x128xf32, #tpu.memory_space<vmem>>, vector<1x8x128xf32>,
    %c0_44 = arith.constant 0 : index
    %c0_45 = arith.constant 0 : index
    %c0_46 = arith.constant 0 : index
    %58 = vector.load %arg1[%c0_44, %c0_45, %c0_46] : memref<4x8x128xf32, #tpu.memory_space<vmem>>, vector<1x8x128xf32>
    %59 = vector.shape_cast %58 : vector<1x8x128xf32> to vector<8x128xf32>
    %c0_47 = arith.constant 0 : index
    %c0_48 = arith.constant 0 : index
    %60 = memref.load %arg2[%c0_47, %c0_48] : memref<5x6xf32, #tpu.memory_space<smem>>
    %61 = vector.broadcast %60 : f32 to vector<8x128xf32>
    %62 = arith.mulf %59, %61 : vector<8x128xf32>
    %c1_49 = arith.constant 1 : index
    %c0_50 = arith.constant 0 : index
    %63 = memref.load %arg2[%c1_49, %c0_50] : memref<5x6xf32, #tpu.memory_space<smem>>
    %c1_51 = arith.constant 1 : index
    %c0_52 = arith.constant 0 : index
    %c0_53 = arith.constant 0 : index
    %64 = vector.load %arg1[%c1_51, %c0_52, %c0_53] : memref<4x8x128xf32, #tpu.memory_space<vmem>>, vector<1x8x128xf32>
    %65 = vector.shape_cast %64 : vector<1x8x128xf32> to vector<8x128xf32>
    %66 = vector.broadcast %63 : f32 to vector<8x128xf32>
    %67 = arith.mulf %66, %65 : vector<8x128xf32>
    %68 = arith.addf %62, %67 : vector<8x128xf32>
    %c2_54 = arith.constant 2 : index
    %c0_55 = arith.constant 0 : index
    %69 = memref.load %arg2[%c2_54, %c0_55] : memref<5x6xf32, #tpu.memory_space<smem>>
    %c2_56 = arith.constant 2 : index
    %c0_57 = arith.constant 0 : index
    %c0_58 = arith.constant 0 : index
    %70 = vector.load %arg1[%c2_56, %c0_57, %c0_58] : memref<4x8x128xf32, #tpu.memory_space<vmem>>, vector<1x8x128xf32>
    %71 = vector.shape_cast %70 : vector<1x8x128xf32> to vector<8x128xf32>
    %72 = vector.broadcast %69 : f32 to vector<8x128xf32>
    %73 = arith.mulf %72, %71 : vector<8x128xf32>
    %74 = arith.addf %68, %73 : vector<8x128xf32>
    %c3_59 = arith.constant 3 : index
    %c0_60 = arith.constant 0 : index
    %75 = memref.load %arg2[%c3_59, %c0_60] : memref<5x6xf32, #tpu.memory_space<smem>>
    %c3_61 = arith.constant 3 : index
    %c0_62 = arith.constant 0 : index
    %c0_63 = arith.constant 0 : index
    %76 = vector.load %arg1[%c3_61, %c0_62, %c0_63] : memref<4x8x128xf32, #tpu.memory_space<vmem>>, vector<1x8x128xf32>
    %77 = vector.shape_cast %76 : vector<1x8x128xf32> to vector<8x128xf32>
    %78 = vector.broadcast %75 : f32 to vector<8x128xf32>
    %79 = arith.mulf %78, %77 : vector<8x128xf32>
    %80 = arith.addf %74, %79 : vector<8x128xf32>
    %c4_64 = arith.constant 4 : index
    %c0_65 = arith.constant 0 : index
    %81 = memref.load %arg2[%c4_64, %c0_65] : memref<5x6xf32, #tpu.memory_space<smem>>
    %82 = vector.broadcast %81 : f32 to vector<8x128xf32>
    %83 = arith.addf %80, %82 : vector<8x128xf32>
    %c0_66 = arith.constant 0 : index
    %c0_67 = arith.constant 0 : index
    %c0_68 = arith.constant 0 : index
    %84 = vector.load %arg1[%c0_66, %c0_67, %c0_68] : memref<4x8x128xf32, #tpu.memory_space<vmem>>, vector<1x8x128xf32>
    %85 = vector.shape_cast %84 : vector<1x8x128xf32> to vector<8x128xf32>
    %c0_69 = arith.constant 0 : index
    %c1_70 = arith.constant 1 : index
    %86 = memref.load %arg2[%c0_69, %c1_70] : memref<5x6xf32, #tpu.memory_space<smem>>
    %87 = vector.broadcast %86 : f32 to vector<8x128xf32>
    %88 = arith.mulf %85, %87 : vector<8x128xf32>
    %c1_71 = arith.constant 1 : index
    %c1_72 = arith.constant 1 : index
    %89 = memref.load %arg2[%c1_71, %c1_72] : memref<5x6xf32, #tpu.memory_space<smem>>
    %c1_73 = arith.constant 1 : index
    %c0_74 = arith.constant 0 : index
    %c0_75 = arith.constant 0 : index
    %90 = vector.load %arg1[%c1_73, %c0_74, %c0_75] : memref<4x8x128xf32, #tpu.memory_space<vmem>>, vector<1x8x128xf32>
    %91 = vector.shape_cast %90 : vector<1x8x128xf32> to vector<8x128xf32>
    %92 = vector.broadcast %89 : f32 to vector<8x128xf32>
    %93 = arith.mulf %92, %91 : vector<8x128xf32>
    %94 = arith.addf %88, %93 : vector<8x128xf32>
    %c2_76 = arith.constant 2 : index
    %c1_77 = arith.constant 1 : index
    %95 = memref.load %arg2[%c2_76, %c1_77] : memref<5x6xf32, #tpu.memory_space<smem>>
    %c2_78 = arith.constant 2 : index
    %c0_79 = arith.constant 0 : index
    %c0_80 = arith.constant 0 : index
    %96 = vector.load %arg1[%c2_78, %c0_79, %c0_80] : memref<4x8x128xf32, #tpu.memory_space<vmem>>, vector<1x8x128xf32>
    %97 = vector.shape_cast %96 : vector<1x8x128xf32> to vector<8x128xf32>
    %98 = vector.broadcast %95 : f32 to vector<8x128xf32>
    %99 = arith.mulf %98, %97 : vector<8x128xf32>
    %100 = arith.addf %94, %99 : vector<8x128xf32>
    %c3_81 = arith.constant 3 : index
    %c1_82 = arith.constant 1 : index
    %101 = memref.load %arg2[%c3_81, %c1_82] : memref<5x6xf32, #tpu.memory_space<smem>>
    %c3_83 = arith.constant 3 : index
    %c0_84 = arith.constant 0 : index
    %c0_85 = arith.constant 0 : index
    %102 = vector.load %arg1[%c3_83, %c0_84, %c0_85] : memref<4x8x128xf32, #tpu.memory_space<vmem>>, vector<1x8x128xf32>
    %103 = vector.shape_cast %102 : vector<1x8x128xf32> to vector<8x128xf32>
    %104 = vector.broadcast %101 : f32 to vector<8x128xf32>
    %105 = arith.mulf %104, %103 : vector<8x128xf32>
    %106 = arith.addf %100, %105 : vector<8x128xf32>
    %c4_86 = arith.constant 4 : index
    %c1_87 = arith.constant 1 : index
    %107 = memref.load %arg2[%c4_86, %c1_87] : memref<5x6xf32, #tpu.memory_space<smem>>
    %108 = vector.broadcast %107 : f32 to vector<8x128xf32>
    %109 = arith.addf %106, %108 : vector<8x128xf32>
    %c0_88 = arith.constant 0 : index
    %c0_89 = arith.constant 0 : index
    %c0_90 = arith.constant 0 : index
    %110 = vector.load %arg1[%c0_88, %c0_89, %c0_90] : memref<4x8x128xf32, #tpu.memory_space<vmem>>, vector<1x8x128xf32>
    %111 = vector.shape_cast %110 : vector<1x8x128xf32> to vector<8x128xf32>
    %c0_91 = arith.constant 0 : index
    %c2_92 = arith.constant 2 : index
    %112 = memref.load %arg2[%c0_91, %c2_92] : memref<5x6xf32, #tpu.memory_space<smem>>
    %113 = vector.broadcast %112 : f32 to vector<8x128xf32>
    %114 = arith.mulf %111, %113 : vector<8x128xf32>
    %c1_93 = arith.constant 1 : index
    %c2_94 = arith.constant 2 : index
    %115 = memref.load %arg2[%c1_93, %c2_94] : memref<5x6xf32, #tpu.memory_space<smem>>
    %c1_95 = arith.constant 1 : index
    %c0_96 = arith.constant 0 : index
    %c0_97 = arith.constant 0 : index
    %116 = vector.load %arg1[%c1_95, %c0_96, %c0_97] : memref<4x8x128xf32, #tpu.memory_space<vmem>>, vector<1x8x128xf32>
    %117 = vector.shape_cast %116 : vector<1x8x128xf32> to vector<8x128xf32>
    %118 = vector.broadcast %115 : f32 to vector<8x128xf32>
    %119 = arith.mulf %118, %117 : vector<8x128xf32>
    %120 = arith.addf %114, %119 : vector<8x128xf32>
    %c2_98 = arith.constant 2 : index
    %c2_99 = arith.constant 2 : index
    %121 = memref.load %arg2[%c2_98, %c2_99] : memref<5x6xf32, #tpu.memory_space<smem>>
    %c2_100 = arith.constant 2 : index
    %c0_101 = arith.constant 0 : index
    %c0_102 = arith.constant 0 : index
    %122 = vector.load %arg1[%c2_100, %c0_101, %c0_102] : memref<4x8x128xf32, #tpu.memory_space<vmem>>, vector<1x8x128xf32>
    %123 = vector.shape_cast %122 : vector<1x8x128xf32> to vector<8x128xf32>
    %124 = vector.broadcast %121 : f32 to vector<8x128xf32>
    %125 = arith.mulf %124, %123 : vector<8x128xf32>
    %126 = arith.addf %120, %125 : vector<8x128xf32>
    %c3_103 = arith.constant 3 : index
    %c2_104 = arith.constant 2 : index
    %127 = memref.load %arg2[%c3_103, %c2_104] : memref<5x6xf32, #tpu.memory_space<smem>>
    %c3_105 = arith.constant 3 : index
    %c0_106 = arith.constant 0 : index
    %c0_107 = arith.constant 0 : index
    %128 = vector.load %arg1[%c3_105, %c0_106, %c0_107] : memref<4x8x128xf32, #tpu.memory_space<vmem>>, vector<1x8x128xf32>
    %129 = vector.shape_cast %128 : vector<1x8x128xf32> to vector<8x128xf32>
    %130 = vector.broadcast %127 : f32 to vector<8x128xf32>
    %131 = arith.mulf %130, %129 : vector<8x128xf32>
    %132 = arith.addf %126, %131 : vector<8x128xf32>
    %c4_108 = arith.constant 4 : index
    %c2_109 = arith.constant 2 : index
    %133 = memref.load %arg2[%c4_108, %c2_109] : memref<5x6xf32, #tpu.memory_space<smem>>
    %134 = vector.broadcast %133 : f32 to vector<8x128xf32>
    %135 = arith.addf %132, %134 : vector<8x128xf32>
    %c0_110 = arith.constant 0 : index
    %c0_111 = arith.constant 0 : index
    %c0_112 = arith.constant 0 : index
    %136 = vector.load %arg1[%c0_110, %c0_111, %c0_112] : memref<4x8x128xf32, #tpu.memory_space<vmem>>, vector<1x8x128xf32>
    %137 = vector.shape_cast %136 : vector<1x8x128xf32> to vector<8x128xf32>
    %c0_113 = arith.constant 0 : index
    %c3_114 = arith.constant 3 : index
    %138 = memref.load %arg2[%c0_113, %c3_114] : memref<5x6xf32, #tpu.memory_space<smem>>
    %139 = vector.broadcast %138 : f32 to vector<8x128xf32>
    %140 = arith.mulf %137, %139 : vector<8x128xf32>
    %c1_115 = arith.constant 1 : index
    %c3_116 = arith.constant 3 : index
    %141 = memref.load %arg2[%c1_115, %c3_116] : memref<5x6xf32, #tpu.memory_space<smem>>
    %c1_117 = arith.constant 1 : index
    %c0_118 = arith.constant 0 : index
    %c0_119 = arith.constant 0 : index
    %142 = vector.load %arg1[%c1_117, %c0_118, %c0_119] : memref<4x8x128xf32, #tpu.memory_space<vmem>>, vector<1x8x128xf32>
    %143 = vector.shape_cast %142 : vector<1x8x128xf32> to vector<8x128xf32>
    %144 = vector.broadcast %141 : f32 to vector<8x128xf32>
    %145 = arith.mulf %144, %143 : vector<8x128xf32>
    %146 = arith.addf %140, %145 : vector<8x128xf32>
    %c2_120 = arith.constant 2 : index
    %c3_121 = arith.constant 3 : index
    %147 = memref.load %arg2[%c2_120, %c3_121] : memref<5x6xf32, #tpu.memory_space<smem>>
    %c2_122 = arith.constant 2 : index
    %c0_123 = arith.constant 0 : index
    %c0_124 = arith.constant 0 : index
    %148 = vector.load %arg1[%c2_122, %c0_123, %c0_124] : memref<4x8x128xf32, #tpu.memory_space<vmem>>, vector<1x8x128xf32>
    %149 = vector.shape_cast %148 : vector<1x8x128xf32> to vector<8x128xf32>
    %150 = vector.broadcast %147 : f32 to vector<8x128xf32>
    %151 = arith.mulf %150, %149 : vector<8x128xf32>
    %152 = arith.addf %146, %151 : vector<8x128xf32>
    %c3_125 = arith.constant 3 : index
    %c3_126 = arith.constant 3 : index
    %153 = memref.load %arg2[%c3_125, %c3_126] : memref<5x6xf32, #tpu.memory_space<smem>>
    %c3_127 = arith.constant 3 : index
    %c0_128 = arith.constant 0 : index
    %c0_129 = arith.constant 0 : index
    %154 = vector.load %arg1[%c3_127, %c0_128, %c0_129] : memref<4x8x128xf32, #tpu.memory_space<vmem>>, vector<1x8x128xf32>
    %155 = vector.shape_cast %154 : vector<1x8x128xf32> to vector<8x128xf32>
    %156 = vector.broadcast %153 : f32 to vector<8x128xf32>
    %157 = arith.mulf %156, %155 : vector<8x128xf32>
    %158 = arith.addf %152, %157 : vector<8x128xf32>
    %c4_130 = arith.constant 4 : index
    %c3_131 = arith.constant 3 : index
    %159 = memref.load %arg2[%c4_130, %c3_131] : memref<5x6xf32, #tpu.memory_space<smem>>
    %160 = vector.broadcast %159 : f32 to vector<8x128xf32>
    %161 = arith.addf %158, %160 : vector<8x128xf32>
    %162 = arith.mulf %83, %109 : vector<8x128xf32>
    %163 = vector.extract_strided_slice %162 {offsets = [0, 0], sizes = [2, 128], strides = [1, 1]} : vector<8x128xf32> to vector<2x128xf32>
    %164 = vector.extract_strided_slice %162 {offsets = [2, 0], sizes = [2, 128], strides = [1, 1]} : vector<8x128xf32> to vector<2x128xf32>
    %165 = arith.addf %163, %164 : vector<2x128xf32>
    %166 = vector.extract_strided_slice %162 {offsets = [4, 0], sizes = [2, 128], strides = [1, 1]} : vector<8x128xf32> to vector<2x128xf32>
    %167 = arith.addf %165, %166 : vector<2x128xf32>
    %168 = vector.extract_strided_slice %162 {offsets = [6, 0], sizes = [2, 128], strides = [1, 1]} : vector<8x128xf32> to vector<2x128xf32>
    %169 = arith.addf %167, %168 : vector<2x128xf32>
    %170 = arith.mulf %169, %169 : vector<2x128xf32>
    %171 = arith.mulf %83, %135 : vector<8x128xf32>
    %172 = vector.extract_strided_slice %171 {offsets = [0, 0], sizes = [2, 128], strides = [1, 1]} : vector<8x128xf32> to vector<2x128xf32>
    %173 = vector.extract_strided_slice %171 {offsets = [2, 0], sizes = [2, 128], strides = [1, 1]} : vector<8x128xf32> to vector<2x128xf32>
    %174 = arith.addf %172, %173 : vector<2x128xf32>
    %175 = vector.extract_strided_slice %171 {offsets = [4, 0], sizes = [2, 128], strides = [1, 1]} : vector<8x128xf32> to vector<2x128xf32>
    %176 = arith.addf %174, %175 : vector<2x128xf32>
    %177 = vector.extract_strided_slice %171 {offsets = [6, 0], sizes = [2, 128], strides = [1, 1]} : vector<8x128xf32> to vector<2x128xf32>
    %178 = arith.addf %176, %177 : vector<2x128xf32>
    %179 = arith.mulf %178, %178 : vector<2x128xf32>
    %180 = arith.addf %170, %179 : vector<2x128xf32>
    %181 = arith.mulf %83, %161 : vector<8x128xf32>
    %182 = vector.extract_strided_slice %181 {offsets = [0, 0], sizes = [2, 128], strides = [1, 1]} : vector<8x128xf32> to vector<2x128xf32>
    %183 = vector.extract_strided_slice %181 {offsets = [2, 0], sizes = [2, 128], strides = [1, 1]} : vector<8x128xf32> to vector<2x128xf32>
    %184 = arith.addf %182, %183 : vector<2x128xf32>
    %185 = vector.extract_strided_slice %181 {offsets = [4, 0], sizes = [2, 128], strides = [1, 1]} : vector<8x128xf32> to vector<2x128xf32>
    %186 = arith.addf %184, %185 : vector<2x128xf32>
    %187 = vector.extract_strided_slice %181 {offsets = [6, 0], sizes = [2, 128], strides = [1, 1]} : vector<8x128xf32> to vector<2x128xf32>
    %188 = arith.addf %186, %187 : vector<2x128xf32>
    %189 = arith.mulf %188, %188 : vector<2x128xf32>
    %190 = arith.addf %180, %189 : vector<2x128xf32>
    %191 = arith.mulf %109, %135 : vector<8x128xf32>
    %192 = vector.extract_strided_slice %191 {offsets = [0, 0], sizes = [2, 128], strides = [1, 1]} : vector<8x128xf32> to vector<2x128xf32>
    %193 = vector.extract_strided_slice %191 {offsets = [2, 0], sizes = [2, 128], strides = [1, 1]} : vector<8x128xf32> to vector<2x128xf32>
    %194 = arith.addf %192, %193 : vector<2x128xf32>
    %195 = vector.extract_strided_slice %191 {offsets = [4, 0], sizes = [2, 128], strides = [1, 1]} : vector<8x128xf32> to vector<2x128xf32>
    %196 = arith.addf %194, %195 : vector<2x128xf32>
    %197 = vector.extract_strided_slice %191 {offsets = [6, 0], sizes = [2, 128], strides = [1, 1]} : vector<8x128xf32> to vector<2x128xf32>
    %198 = arith.addf %196, %197 : vector<2x128xf32>
    %199 = arith.mulf %198, %198 : vector<2x128xf32>
    %200 = arith.addf %190, %199 : vector<2x128xf32>
    %201 = arith.mulf %109, %161 : vector<8x128xf32>
    %202 = vector.extract_strided_slice %201 {offsets = [0, 0], sizes = [2, 128], strides = [1, 1]} : vector<8x128xf32> to vector<2x128xf32>
    %203 = vector.extract_strided_slice %201 {offsets = [2, 0], sizes = [2, 128], strides = [1, 1]} : vector<8x128xf32> to vector<2x128xf32>
    %204 = arith.addf %202, %203 : vector<2x128xf32>
    %205 = vector.extract_strided_slice %201 {offsets = [4, 0], sizes = [2, 128], strides = [1, 1]} : vector<8x128xf32> to vector<2x128xf32>
    %206 = arith.addf %204, %205 : vector<2x128xf32>
    %207 = vector.extract_strided_slice %201 {offsets = [6, 0], sizes = [2, 128], strides = [1, 1]} : vector<8x128xf32> to vector<2x128xf32>
    %208 = arith.addf %206, %207 : vector<2x128xf32>
    %209 = arith.mulf %208, %208 : vector<2x128xf32>
    %210 = arith.addf %200, %209 : vector<2x128xf32>
    %211 = arith.mulf %135, %161 : vector<8x128xf32>
    %212 = vector.extract_strided_slice %211 {offsets = [0, 0], sizes = [2, 128], strides = [1, 1]} : vector<8x128xf32> to vector<2x128xf32>
    %213 = vector.extract_strided_slice %211 {offsets = [2, 0], sizes = [2, 128], strides = [1, 1]} : vector<8x128xf32> to vector<2x128xf32>
    %214 = arith.addf %212, %213 : vector<2x128xf32>
    %215 = vector.extract_strided_slice %211 {offsets = [4, 0], sizes = [2, 128], strides = [1, 1]} : vector<8x128xf32> to vector<2x128xf32>
    %216 = arith.addf %214, %215 : vector<2x128xf32>
    %217 = vector.extract_strided_slice %211 {offsets = [6, 0], sizes = [2, 128], strides = [1, 1]} : vector<8x128xf32> to vector<2x128xf32>
    %218 = arith.addf %216, %217 : vector<2x128xf32>
    %219 = arith.mulf %218, %218 : vector<2x128xf32>
    %220 = arith.addf %210, %219 : vector<2x128xf32>
    %cst = arith.constant 2.000000e+00 : f32
    %221 = vector.broadcast %cst : f32 to vector<2x128xf32>
    %222 = arith.mulf %221, %220 : vector<2x128xf32>
    %223 = math.sqrt %222 : vector<2x128xf32>
    %c0_132 = arith.constant 0 : index
    %c0_133 = arith.constant 0 : index
    %224 = vector.load %arg4[%c0_132, %c0_133] : memref<2x128xf32, #tpu.memory_space<vmem>>, vector<2x128xf32>
    tpu.vector_store %arg4[%c0_132, %c0_133], %223 {strides = array<i32>} : memref<2x128xf32, #tpu.memory_space<vmem>>, vector<2x128xf32>,
    return
  }
  func.func @transform_0(%arg0: i32) -> (i32, i32, i32) {
    %c0_i32 = arith.constant 0 : i32
    %c0_i32_0 = arith.constant 0 : i32
    %c0_i32_1 = arith.constant 0 : i32
    return %c0_i32, %c0_i32_0, %arg0 : i32, i32, i32
  }
  func.func @transform_1(%arg0: i32) -> (i32, i32) {
    %c0_i32 = arith.constant 0 : i32
    %c0_i32_0 = arith.constant 0 : i32
    %c0_i32_1 = arith.constant 0 : i32
    return %c0_i32, %c0_i32_0 : i32, i32
  }
  func.func @transform_2(%arg0: i32) -> (i32, i32, i32) {
    %c0_i32 = arith.constant 0 : i32
    %c0_i32_0 = arith.constant 0 : i32
    %c0_i32_1 = arith.constant 0 : i32
    return %c0_i32, %c0_i32_0, %arg0 : i32, i32, i32
  }
  func.func @transform_3(%arg0: i32) -> (i32, i32) {
    %c0_i32 = arith.constant 0 : i32
    %c0_i32_0 = arith.constant 0 : i32
    return %c0_i32, %arg0 : i32, i32
  }
}

</mosaic_0001>

<llo_original>
// kernel: tpu_custom_call.1
$region0: #{tpu_custom_call.1}
  #allocation0 [shape = 'u32[]', space=smem, size = 0x4, offset = 0x4, fixed_abs, tag = 'smem constant byte address 0x4 - core index']
  #allocation1 [shape = 'u32[72,128]{1,0:T(1,128)}', space=vmem, size = 0x9000, scoped, tag = 'internal scratch']
  %s0 = inlined_call_operand.hbm [shape: f32[4,8,128], index: 0, kind: input, shape index: {}]
  %s1 = inlined_call_operand.hbm [shape: f32[5,6], index: 1, kind: input, shape index: {}]
  %s2 = inlined_call_operand.hbm [shape: f32[2,8,128], index: 2, kind: output, shape index: {0}]
  %s3 = inlined_call_operand.hbm [shape: f32[2,128], index: 3, kind: output, shape index: {1}]
  %4 = xla_tuple %s2, %s3
  %s5 = sld [smem:[#allocation0]]
  $region34: #{tpu_custom_call.1} parent=0
    _
  %s7 = ssub.s32 1, %s5
  %s8 = scalar_select 0, %s7, %s5
  $region1: #{tpu_custom_call.1} parent=0
    #allocation2 [shape = 'u8[16384]{0}', space=vmem, size = 0x4000, scoped, tag = 'input window, operand 0, single buffered']
    #allocation3 [shape = 's32[1]{0}', space=sflag, size = 0x4, scoped, tag = 'scoped memory for tpu_custom_call.1']
    #allocation4 [shape = 's32[1]{0}', space=sflag, size = 0x4, scoped, tag = 'scoped memory for tpu_custom_call.1']
    #allocation5 [shape = 's32[1]{0}', space=sflag, size = 0x4, scoped, tag = 'scoped memory for tpu_custom_call.1']
    #allocation6 [shape = 'u8[4096]{0}', space=smem, size = 0x1000, scoped, tag = 'input window, operand 1, single buffered']
    #allocation7 [shape = 'u8[8192]{0}', space=vmem, size = 0x2000, scoped, tag = 'output window, operand 0, single buffered']
    #allocation8 [shape = 'u8[1024]{0}', space=vmem, size = 0x400, scoped, tag = 'output window, operand 1, single buffered']
    #allocation9 [shape = 's32[1]{0}', space=sflag, size = 0x4, scoped, tag = 'scoped memory for tpu_custom_call.1']
    %9 = vsyncpa [#allocation3], 0
    %10 = vsyncpa [#allocation5], 0
    %11 = vsyncpa [#allocation4], 0
    %12 = vsyncpa [#allocation9], 0
    // Predicated region
    $region2: #{tpu_custom_call.1} parent=1 // pred_check
      _
    $region3: #{tpu_custom_call.1} parent=1 // pred_check_branch
      %14 = sbr.rel (0) target = $region5
    $region4: #{tpu_custom_call.1} parent=1 // pred_region
      %16 = vsyncadd [#allocation3], 0
      %s17 = sshll.u32 %s0, 4
      %s18 = int_to_ptr.hbm [resolvable:$true] %s17
      %s19 = sshll.u32 [#allocation2], 4
      %s20 = int_to_ptr.vmem [resolvable:$true] %s19
      %25 = dma.hbm_to_vmem [thread:$0]  %s18, 512, %s20, [#allocation3], 128, 128, 8
    $region5: #{tpu_custom_call.1} parent=1 // pred_fallthru
      _
    // Predicated region
    $region6: #{tpu_custom_call.1} parent=1 // pred_check
      _
    $region7: #{tpu_custom_call.1} parent=1 // pred_check_branch
      %27 = sbr.rel (0) target = $region9
    $region8: #{tpu_custom_call.1} parent=1 // pred_region
      %29 = vsyncadd [#allocation5], 0
      %s31 = sshll.u32 %s1, 4
      %s32 = int_to_ptr.hbm [resolvable:$true] %s31
      %34 = dma.hbm_to_smem %s32, 128, [#allocation6], [#allocation5]
    $region9: #{tpu_custom_call.1} parent=1 // pred_fallthru
      _
    // Predicated region
    $region10: #{tpu_custom_call.1} parent=1 // pred_check
      _
    $region11: #{tpu_custom_call.1} parent=1 // pred_check_branch
      %36 = sbr.rel (0) target = $region13
    $region12: #{tpu_custom_call.1} parent=1 // pred_region
      %38 = dma.done [#allocation3], 512
    $region13: #{tpu_custom_call.1} parent=1 // pred_fallthru
      _
    // Predicated region
    $region14: #{tpu_custom_call.1} parent=1 // pred_check
      _
    $region15: #{tpu_custom_call.1} parent=1 // pred_check_branch
      %40 = sbr.rel (0) target = $region17
    $region16: #{tpu_custom_call.1} parent=1 // pred_region
      %42 = dma.done [#allocation5], 128
    $region17: #{tpu_custom_call.1} parent=1 // pred_fallthru
      _
    %43 = sfence
    %v44 = vld [vmem:[#allocation2] sm:$0xff]
    %s45 = sld [smem:[#allocation6 + $0x4]]
    %v46 = vstv %s45
    %v47 = vmul.f32 %v44, %v46
    %s48 = sld [smem:[#allocation6 + $0x84]]
    %s49 = scalar_lea.vmem [#allocation2], 8
    %v50 = vld [vmem:[%s49] sm:$0xff]
    %v51 = vstv %s48
    %v52 = vmul.f32 %v51, %v50
    %v53 = vadd.f32 %v47, %v52
    %s54 = sld [smem:[#allocation6 + $0x104]]
    %s55 = scalar_lea.vmem [#allocation2], 16
    %v56 = vld [vmem:[%s55] sm:$0xff]
    %v57 = vstv %s54
    %v58 = vmul.f32 %v57, %v56
    %v59 = vadd.f32 %v53, %v58
    %s60 = sld [smem:[#allocation6 + $0x184]]
    %s61 = scalar_lea.vmem [#allocation2], 24
    %v62 = vld [vmem:[%s61] sm:$0xff]
    %v63 = vstv %s60
    %v64 = vmul.f32 %v63, %v62
    %v65 = vadd.f32 %v59, %v64
    %s66 = sld [smem:[#allocation6 + $0x204]]
    %v67 = vstv %s66
    %v68 = vadd.f32 %v65, %v67
    %69 = vst [vmem:[#allocation7] sm:$0xff] %v68
    %v70 = vld [vmem:[#allocation2] sm:$0xff]
    %s71 = sld [smem:[#allocation6 + $0x5]]
    %v72 = vstv %s71
    %v73 = vmul.f32 %v70, %v72
    %s74 = sld [smem:[#allocation6 + $0x85]]
    %v75 = vld [vmem:[%s49] sm:$0xff]
    %v76 = vstv %s74
    %v77 = vmul.f32 %v76, %v75
    %v78 = vadd.f32 %v73, %v77
    %s79 = sld [smem:[#allocation6 + $0x105]]
    %v80 = vld [vmem:[%s55] sm:$0xff]
    %v81 = vstv %s79
    %v82 = vmul.f32 %v81, %v80
    %v83 = vadd.f32 %v78, %v82
    %s84 = sld [smem:[#allocation6 + $0x185]]
    %v85 = vld [vmem:[%s61] sm:$0xff]
    %v86 = vstv %s84
    %v87 = vmul.f32 %v86, %v85
    %v88 = vadd.f32 %v83, %v87
    %s89 = sld [smem:[#allocation6 + $0x205]]
    %v90 = vstv %s89
    %v91 = vadd.f32 %v88, %v90
    %s92 = scalar_lea.vmem [#allocation7], 8
    %93 = vst [vmem:[%s92] sm:$0xff] %v91
    %v94 = vld [vmem:[#allocation2] sm:$0xff]
    %s95 = sld [smem:[#allocation6]]
    %v96 = vstv %s95
    %v97 = vmul.f32 %v94, %v96
    %s98 = sld [smem:[#allocation6 + $0x80]]
    %v99 = vld [vmem:[%s49] sm:$0xff]
    %v100 = vstv %s98
    %v101 = vmul.f32 %v100, %v99
    %v102 = vadd.f32 %v97, %v101
    %s103 = sld [smem:[#allocation6 + $0x100]]
    %v104 = vld [vmem:[%s55] sm:$0xff]
    %v105 = vstv %s103
    %v106 = vmul.f32 %v105, %v104
    %v107 = vadd.f32 %v102, %v106
    %s108 = sld [smem:[#allocation6 + $0x180]]
    %v109 = vld [vmem:[%s61] sm:$0xff]
    %v110 = vstv %s108
    %v111 = vmul.f32 %v110, %v109
    %v112 = vadd.f32 %v107, %v111
    %s113 = sld [smem:[#allocation6 + $0x200]]
    %v114 = vstv %s113
    %v115 = vadd.f32 %v112, %v114
    %s116 = sld [smem:[#allocation6 + $0x1]]
    %v117 = vstv %s116
    %v118 = vmul.f32 %v94, %v117
    %s119 = sld [smem:[#allocation6 + $0x81]]
    %v120 = vstv %s119
    %v121 = vmul.f32 %v120, %v99
    %v122 = vadd.f32 %v118, %v121
    %s123 = sld [smem:[#allocation6 + $0x101]]
    %v124 = vstv %s123
    %v125 = vmul.f32 %v124, %v104
    %v126 = vadd.f32 %v122, %v125
    %s127 = sld [smem:[#allocation6 + $0x181]]
    %v128 = vstv %s127
    %v129 = vmul.f32 %v128, %v109
    %v130 = vadd.f32 %v126, %v129
    %s131 = sld [smem:[#allocation6 + $0x201]]
    %v132 = vstv %s131
    %v133 = vadd.f32 %v130, %v132
    %s134 = sld [smem:[#allocation6 + $0x2]]
    %v135 = vstv %s134
    %v136 = vmul.f32 %v94, %v135
    %s137 = sld [smem:[#allocation6 + $0x82]]
    %v138 = vstv %s137
    %v139 = vmul.f32 %v138, %v99
    %v140 = vadd.f32 %v136, %v139
    %s141 = sld [smem:[#allocation6 + $0x102]]
    %v142 = vstv %s141
    %v143 = vmul.f32 %v142, %v104
    %v144 = vadd.f32 %v140, %v143
    %s145 = sld [smem:[#allocation6 + $0x182]]
    %v146 = vstv %s145
    %v147 = vmul.f32 %v146, %v109
    %v148 = vadd.f32 %v144, %v147
    %s149 = sld [smem:[#allocation6 + $0x202]]
    %v150 = vstv %s149
    %v151 = vadd.f32 %v148, %v150
    %s152 = sld [smem:[#allocation6 + $0x3]]
    %v153 = vstv %s152
    %v154 = vmul.f32 %v94, %v153
    %s155 = sld [smem:[#allocation6 + $0x83]]
    %v156 = vstv %s155
    %v157 = vmul.f32 %v156, %v99
    %v158 = vadd.f32 %v154, %v157
    %s159 = sld [smem:[#allocation6 + $0x103]]
    %v160 = vstv %s159
    %v161 = vmul.f32 %v160, %v104
    %v162 = vadd.f32 %v158, %v161
    %s163 = sld [smem:[#allocation6 + $0x183]]
    %v164 = vstv %s163
    %v165 = vmul.f32 %v164, %v109
    %v166 = vadd.f32 %v162, %v165
    %s167 = sld [smem:[#allocation6 + $0x203]]
    %v168 = vstv %s167
    %v169 = vadd.f32 %v166, %v168
    %v170 = vmul.f32 %v115, %v133
    %v172 = vrot.slane %v170, 2
    %v174 = vadd.f32 %v170, %v172
    %v175 = vrot.slane %v170, 4
    %v177 = vadd.f32 %v174, %v175
    %v178 = vrot.slane %v170, 6
    %v180 = vadd.f32 %v177, %v178
    %v181 = vmul.f32 %v180, %v180
    %v182 = vmul.f32 %v115, %v151
    %v184 = vrot.slane %v182, 2
    %v186 = vadd.f32 %v182, %v184
    %v187 = vrot.slane %v182, 4
    %v189 = vadd.f32 %v186, %v187
    %v190 = vrot.slane %v182, 6
    %v192 = vadd.f32 %v189, %v190
    %v193 = vmul.f32 %v192, %v192
    %v194 = vadd.f32 %v181, %v193
    %v195 = vmul.f32 %v115, %v169
    %v197 = vrot.slane %v195, 2
    %v199 = vadd.f32 %v195, %v197
    %v200 = vrot.slane %v195, 4
    %v202 = vadd.f32 %v199, %v200
    %v203 = vrot.slane %v195, 6
    %v205 = vadd.f32 %v202, %v203
    %v206 = vmul.f32 %v205, %v205
    %v207 = vadd.f32 %v194, %v206
    %v208 = vmul.f32 %v133, %v151
    %v210 = vrot.slane %v208, 2
    %v212 = vadd.f32 %v208, %v210
    %v213 = vrot.slane %v208, 4
    %v215 = vadd.f32 %v212, %v213
    %v216 = vrot.slane %v208, 6
    %v218 = vadd.f32 %v215, %v216
    %v219 = vmul.f32 %v218, %v218
    %v220 = vadd.f32 %v207, %v219
    %v221 = vmul.f32 %v133, %v169
    %v223 = vrot.slane %v221, 2
    %v225 = vadd.f32 %v221, %v223
    %v226 = vrot.slane %v221, 4
    %v228 = vadd.f32 %v225, %v226
    %v229 = vrot.slane %v221, 6
    %v231 = vadd.f32 %v228, %v229
    %v232 = vmul.f32 %v231, %v231
    %v233 = vadd.f32 %v220, %v232
    %v234 = vmul.f32 %v151, %v169
    %v236 = vrot.slane %v234, 2
    %v238 = vadd.f32 %v234, %v236
    %v239 = vrot.slane %v234, 4
    %v241 = vadd.f32 %v238, %v239
    %v242 = vrot.slane %v234, 6
    %v244 = vadd.f32 %v241, %v242
    %v245 = vmul.f32 %v244, %v244
    %v246 = vadd.f32 %v233, %v245
    %v247 = vmul.f32 %v246, 2.0
    %v248 = vrsqrt.pop %v247
    %v249 = vmul.f32 %v248, %v247
    %v250 = vmul.f32 %v249, %v248
    %v251 = vmul.f32 0.5, %v250
    %v252 = vsub.f32 1.5, %v251
    %v253 = vmul.f32 %v248, %v252
    %v254 = vmul.f32 %v247, %v253
    %vm255 = vcmp.eq.f32.partialorder %v247, inf
    %v256 = vsel %vm255, %v247, %v254
    %vm257 = vcmp.eq.f32.partialorder %v247, 0.0
    %v258 = vand.u32 %v247, 2147483648
    %v259 = vsel %vm257, %v258, %v256
    %260 = vst [vmem:[#allocation8] sm:$0x3] %v259
    // Predicated region
    $region18: #{tpu_custom_call.1} parent=1 // pred_check
      _
    $region19: #{tpu_custom_call.1} parent=1 // pred_check_branch
      %262 = sbr.rel (0) target = $region21
    $region20: #{tpu_custom_call.1} parent=1 // pred_region
      %264 = vsyncadd [#allocation4], 0
      %s265 = sshll.u32 [#allocation7], 4
      %s266 = int_to_ptr.vmem [resolvable:$true] %s265
      %s267 = sshll.u32 %s2, 4
      %s268 = int_to_ptr.hbm [resolvable:$true] %s267
      %273 = dma.vmem_to_hbm [thread:$0]  %s266, 256, %s268, [#allocation4], 128, 128, 8
    $region21: #{tpu_custom_call.1} parent=1 // pred_fallthru
      _
    // Predicated region
    $region22: #{tpu_custom_call.1} parent=1 // pred_check
      _
    $region23: #{tpu_custom_call.1} parent=1 // pred_check_branch
      %275 = sbr.rel (0) target = $region25
    $region24: #{tpu_custom_call.1} parent=1 // pred_region
      %277 = vsyncadd [#allocation9], 0
      %s279 = sshll.u32 [#allocation8], 4
      %s280 = int_to_ptr.vmem [resolvable:$true] %s279
      %s281 = sshll.u32 %s3, 4
      %s282 = int_to_ptr.hbm [resolvable:$true] %s281
      %284 = dma.vmem_to_hbm [thread:$0]  %s280, 32, %s282, [#allocation9]
    $region25: #{tpu_custom_call.1} parent=1 // pred_fallthru
      _
    // Predicated region
    $region26: #{tpu_custom_call.1} parent=1 // pred_check
      _
    $region27: #{tpu_custom_call.1} parent=1 // pred_check_branch
      %286 = sbr.rel (0) target = $region29
    $region28: #{tpu_custom_call.1} parent=1 // pred_region
      %288 = dma.done [#allocation4], 256
    $region29: #{tpu_custom_call.1} parent=1 // pred_fallthru
      _
    // Predicated region
    $region30: #{tpu_custom_call.1} parent=1 // pred_check
      _
    $region31: #{tpu_custom_call.1} parent=1 // pred_check_branch
      %290 = sbr.rel (0) target = $region33
    $region32: #{tpu_custom_call.1} parent=1 // pred_region
      %292 = dma.done [#allocation9], 32
    $region33: #{tpu_custom_call.1} parent=1 // pred_fallthru
      _
    %293 = vsyncpa [#allocation3], 1
    %294 = vsyncpa [#allocation4], 1
    %295 = vsyncpa [#allocation9], 1
    %296 = vsyncpa [#allocation5], 1

</llo_original>
